<compile_context>
chip_gen: v6e
topology: v6e:2x2x1
jax: 0.10.0
libtpu: 0.0.40
codegen_flags: <defaults>
</compile_context>

<pallas_src>
import functools

import jax
import jax.numpy as jnp
from jax import lax
from jax.experimental import pallas as pl
from jax.experimental.pallas import tpu as pltpu

_MIB = 1024 * 1024


def _round_up(x, m):
    return ((x + m - 1) // m) * m


def _vmem_budget_cap():
    """~75% of physical per-core VMEM (headroom for compiler scratch)."""
    try:
        return int(0.75 * pltpu.get_tpu_info().vmem_capacity_bytes)
    except Exception:
        return 48 * _MIB  # conservative; safe on v5e / v6e / v7x


# ---------------------------------------------------------------------------
# kernel helpers
# ---------------------------------------------------------------------------
def _bias_relu(h_f32, b1, compute_dtype, bf16_elementwise):
    """bias + ReLU on the (tm, F) hidden tile; returns compute_dtype operand."""
    if bf16_elementwise and compute_dtype != jnp.float32:
        # bf16 VALU on v6e/v7x processes 2x elements per vreg op; h is rounded
        # to compute_dtype before the 2nd matmul anyway, so accuracy unchanged.
        return jnp.maximum(h_f32.astype(compute_dtype)
                           + b1.astype(compute_dtype), 0)
    h = jnp.maximum(h_f32 + b1.astype(jnp.float32), 0.0)
    return h.astype(compute_dtype)


def _residual_layernorm_store(x_f32, y_f32, b2_ref, g_ref, beta_ref, o_ref, eps):
    z = x_f32 + y_f32 + b2_ref[...].astype(jnp.float32)
    mean = jnp.mean(z, axis=-1, keepdims=True)
    diff = z - mean
    var = jnp.mean(diff * diff, axis=-1, keepdims=True)
    zn = diff * lax.rsqrt(var + eps)
    o_ref[...] = (zn * g_ref[...].astype(jnp.float32)
                  + beta_ref[...].astype(jnp.float32)).astype(o_ref.dtype)


# ---------------------------------------------------------------------------
# kernels
# ---------------------------------------------------------------------------
def _ffn_kernel_resident(x_ref, w1_ref, b1_ref, w2_ref, b2_ref, g_ref,
                         beta_ref, o_ref, *, eps, compute_dtype,
                         bf16_elementwise):
    """One (tm, D) row tile; full weights resident in VMEM (grid = rows)."""
    x = x_ref[...]
    h = jnp.dot(x.astype(compute_dtype), w1_ref[...],
                preferred_element_type=jnp.float32)
    hc = _bias_relu(h, b1_ref[...], compute_dtype, bf16_elementwise)
    y = jnp.dot(hc, w2_ref[...], preferred_element_type=jnp.float32)
    _residual_layernorm_store(x.astype(jnp.float32), y,
                              b2_ref, g_ref, beta_ref, o_ref, eps)


def _ffn_kernel_streamed(x_ref, w1_ref, b1_ref, w2_ref, b2_ref, g_ref,
                         beta_ref, o_ref, acc_ref, xc_ref, *, eps,
                         compute_dtype, bf16_elementwise):
    """One (tm, D) row tile x one (tf) hidden slice; grid = (rows, hidden)."""
    k = pl.program_id(1)
    nk = pl.num_programs(1)

    @pl.when(k == 0)
    def _cache_x():  # cast the resident x tile to compute dtype exactly once
        xc_ref[...] = x_ref[...].astype(compute_dtype)

    h = jnp.dot(xc_ref[...], w1_ref[...], preferred_element_type=jnp.float32)
    hc = _bias_relu(h, b1_ref[...], compute_dtype, bf16_elementwise)
    part = jnp.dot(hc, w2_ref[...], preferred_element_type=jnp.float32)

    @pl.when(k == 0)
    def _first():            # write directly: no zero-init store/read pass
        acc_ref[...] = part

    @pl.when(k > 0)
    def _accum():
        acc_ref[...] += part

    @pl.when(k == nk - 1)
    def _finalize():
        _residual_layernorm_store(x_ref[...].astype(jnp.float32), acc_ref[...],
                                  b2_ref, g_ref, beta_ref, o_ref, eps)


# ---------------------------------------------------------------------------
# wrapper
# ---------------------------------------------------------------------------
def positional_wise_feed_forward(x, w1, b1, w2, b2, gamma, beta,
                                 *, eps=1e-5, tm=256, tf=512,
                                 compute_dtype=jnp.bfloat16,
                                 bf16_elementwise=True):
    """x: (B, L, D). w1: (D, F), b1: (F,), w2: (F, D), b2/gamma/beta: (D,).

    Eval-mode forward (dropout == identity).  Set bf16_elementwise=False on
    v5e (no bf16 VALU) and/or compute_dtype=jnp.float32 for exact math.
    """
    B, L, D = x.shape
    F_ = w1.shape[1]
    M = B * L

    bx = jnp.dtype(x.dtype).itemsize
    bw = jnp.dtype(compute_dtype).itemsize
    cap = _vmem_budget_cap()

    # --- row tiling: multiple of 8, cdiv grid + zero padding; keep >= 2 row
    #     tiles so the "parallel" axis spans both TensorCores on v7x. ---------
    tm = max(8, (min(tm, _round_up(M, 8)) // 8) * 8)
    if M > 8:
        tm = min(tm, max(8, _round_up(pl.cdiv(M, 2), 8)))

    # --- resident-weight feasibility (weights single-buffered in VMEM) -------
    def _resident_need(tm_):
        return (4 * tm_ * D * bx                # x + out tiles, double-buffered
                + 2 * D * F_ * bw               # w1 + w2, single-buffered
                + (F_ + 3 * D) * 4              # b1 / b2 / gamma / beta (f32)
                + tm_ * F_ * (4 + bw)           # h: f32 dot result + compute copy
                + 2 * tm_ * D * 4)              # LayerNorm temporaries

    resident = _resident_need(tm) <= cap

    if resident:
        F_pad = F_
        vmem_need = _resident_need(tm)
    else:
        # streamed weights: raise row tile to amortize HBM weight traffic,
        # lane-aligned hidden slices, shrink to fit the per-chip VMEM budget.
        tf = max(128, (min(tf, _round_up(F_, 128)) // 128) * 128)
        tm_s = min(1024, _round_up(M, 8))
        if M > 8:
            tm_s = min(tm_s, max(8, _round_up(pl.cdiv(M, 2), 8)))
        tm_s = max(8, (tm_s // 8) * 8)

        def _stream_need(tm_, tf_):
            return (4 * tm_ * D * bx            # x + out tiles
                    + 2 * (2 * D * tf_) * bw    # w1/w2 slices, double-buffered
                    + 2 * tf_ * 4 + 3 * D * 4   # biases / gamma / beta
                    + tm_ * D * 4               # f32 accumulator scratch
                    + tm_ * D * bw              # cached compute-dtype x scratch
                    + tm_ * tf_ * (4 + bw))     # h + compute copy

        while _stream_need(tm_s, tf) > cap and tm_s > 256:
            tm_s = max(256, ((tm_s // 2) // 8) * 8)
        while _stream_need(tm_s, tf) > cap and tf > 128:
            tf = max(128, tf // 2)
        tm = tm_s
        F_pad = _round_up(F_, tf)
        vmem_need = _stream_need(tm, tf)

    M_pad = pl.cdiv(M, tm) * tm

    # --- host-side prep: flatten tokens, pad rows / hidden dim ---------------
    x2 = x.reshape(M, D)
    if M_pad != M:
        x2 = jnp.pad(x2, ((0, M_pad - M), (0, 0)))

    w1c = w1.astype(compute_dtype)
    w2c = w2.astype(compute_dtype)
    b1p = b1
    if F_pad != F_:
        w1c = jnp.pad(w1c, ((0, 0), (0, F_pad - F_)))
        w2c = jnp.pad(w2c, ((0, F_pad - F_), (0, 0)))
        b1p = jnp.pad(b1, ((0, F_pad - F_),))
    b1_2 = b1p.reshape(1, F_pad).astype(jnp.float32)
    b2_2 = b2.reshape(1, D).astype(jnp.float32)
    g_2 = gamma.reshape(1, D).astype(jnp.float32)
    bt_2 = beta.reshape(1, D).astype(jnp.float32)

    n_row_tiles = M_pad // tm
    weight_passes = 1 if resident else n_row_tiles
    cost = pl.CostEstimate(
        flops=4 * M * D * F_,                    # two (M, D, F) matmuls
        transcendentals=M,                       # one rsqrt per token
        bytes_accessed=(2 * M * D * bx
                        + weight_passes * 2 * D * F_pad * bw
                        + (F_pad + 3 * D) * 4))

    vmem_limit = int(min(max(int(1.5 * vmem_need), 32 * _MIB), cap))

    def _invariant_spec(shape, imap, use_buffered):
        if use_buffered:
            try:
                return pl.BlockSpec(shape, imap, pipeline_mode=pl.Buffered(1))
            except (AttributeError, TypeError):
                pass
        return pl.BlockSpec(shape, imap)

    def _run(use_buffered):
        if resident:
            kernel = functools.partial(_ffn_kernel_resident, eps=eps,
                                       compute_dtype=compute_dtype,
                                       bf16_elementwise=bf16_elementwise)
            grid = (n_row_tiles,)
            in_specs = [
                pl.BlockSpec((tm, D), lambda i: (i, 0)),                    # x rows
                _invariant_spec((D, F_pad), lambda i: (0, 0), use_buffered),  # w1
                _invariant_spec((1, F_pad), lambda i: (0, 0), use_buffered),  # b1
                _invariant_spec((F_pad, D), lambda i: (0, 0), use_buffered),  # w2
                _invariant_spec((1, D), lambda i: (0, 0), use_buffered),      # b2
                _invariant_spec((1, D), lambda i: (0, 0), use_buffered),      # gamma
                _invariant_spec((1, D), lambda i: (0, 0), use_buffered),      # beta
            ]
            out_spec = pl.BlockSpec((tm, D), lambda i: (i, 0))
            scratch = []
            semantics = ("parallel",)
        else:
            kernel = functools.partial(_ffn_kernel_streamed, eps=eps,
                                       compute_dtype=compute_dtype,
                                       bf16_elementwise=bf16_elementwise)
            grid = (n_row_tiles, F_pad // tf)
            in_specs = [
                pl.BlockSpec((tm, D), lambda i, k: (i, 0)),                 # x rows
                pl.BlockSpec((D, tf), lambda i, k: (0, k)),                 # w1 slice
                pl.BlockSpec((1, tf), lambda i, k: (0, k)),                 # b1 slice
                pl.BlockSpec((tf, D), lambda i, k: (k, 0)),                 # w2 slice
                _invariant_spec((1, D), lambda i, k: (0, 0), use_buffered),  # b2
                _invariant_spec((1, D), lambda i, k: (0, 0), use_buffered),  # gamma
                _invariant_spec((1, D), lambda i, k: (0, 0), use_buffered),  # beta
            ]
            out_spec = pl.BlockSpec((tm, D), lambda i, k: (i, 0))
            scratch = [pltpu.VMEM((tm, D), jnp.float32),      # accumulator
                       pltpu.VMEM((tm, D), compute_dtype)]    # cached x cast
            semantics = ("parallel", "arbitrary")

        return pl.pallas_call(
            kernel,
            out_shape=jax.ShapeDtypeStruct((M_pad, D), x.dtype),
            grid_spec=pltpu.PrefetchScalarGridSpec(
                num_scalar_prefetch=0,
                grid=grid,
                in_specs=in_specs,
                out_specs=out_spec,
                scratch_shapes=scratch),
            compiler_params=pltpu.CompilerParams(
                dimension_semantics=semantics,
                vmem_limit_bytes=vmem_limit),
            cost_estimate=cost,
        )(x2, w1c, b1_2, w2c, b2_2, g_2, bt_2)

    try:
        out = _run(True)
    except Exception:
        # TODO(synk): drop fallback once pl.Buffered(1) is universally supported.
        out = _run(False)

    if M_pad != M:
        out = out[:M]
    return out.reshape(B, L, D)


# ---------------------------------------------------------------------------
# plain-JAX reference of the PyTorch forward (eval mode)
# ---------------------------------------------------------------------------
def _reference(x, w1, b1, w2, b2, gamma, beta, eps=1e-5):
    h = jnp.maximum(jnp.einsum("bld,df->blf", x, w1) + b1, 0.0)
    y = jnp.einsum("blf,fd->bld", h, w2) + b2
    z = x + y
    mu = z.mean(-1, keepdims=True)
    var = ((z - mu) ** 2).mean(-1, keepdims=True)
    return (z - mu) / jnp.sqrt(var + eps) * gamma + beta


if __name__ == "__main__":
    # small shapes consistent with the module: (batch, seq, mode_dims), ffn_dim
    B, L, D, F_ = 2, 8, 32, 64

    key = jax.random.PRNGKey(0)
    kx, k1, kb1, k2, kb2 = jax.random.split(key, 5)

    x = jax.random.normal(kx, (B, L, D), dtype=jnp.float32)

    # Conv1d(mode_dims, ffn_dim, 1).weight is (F, D, 1); stored here as the
    # equivalent per-token linear (D, F) so the kernel computes x @ w1.
    w1 = jax.random.normal(k1, (D, F_), dtype=jnp.float32) * 0.1
    b1 = jax.random.normal(kb1, (F_,), dtype=jnp.float32) * 0.1
    w2 = jax.random.normal(k2, (F_, D), dtype=jnp.float32) * 0.1
    b2 = jax.random.normal(kb2, (D,), dtype=jnp.float32) * 0.1
    gamma = jnp.ones((D,), dtype=jnp.float32)
    beta = jnp.zeros((D,), dtype=jnp.float32)

    ref = _reference(x, w1, b1, w2, b2, gamma, beta)

    # 1) f32 MXU path: tight check against the plain-JAX reference.
    out_f32 = positional_wise_feed_forward(x, w1, b1, w2, b2, gamma, beta,
                                           compute_dtype=jnp.float32)
    out_f32 = jax.block_until_ready(out_f32)
    assert out_f32.shape == (B, L, D)
    assert jnp.allclose(out_f32, ref, atol=1e-4, rtol=1e-4), "f32 path mismatch"

    # 2) default bf16-operand path (fast on v6e/v7x): f32 accumulation +
    #    LayerNorm, only matmul-operand rounding differs -> looser tolerance.
    out_bf16 = positional_wise_feed_forward(x, w1, b1, w2, b2, gamma, beta)
    out_bf16 = jax.block_until_ready(out_bf16)
    assert jnp.allclose(out_bf16, ref, atol=5e-2, rtol=5e-2), "bf16 path mismatch"

    # 3) non-divisible token count exercises the cdiv + row-padding path.
    xr = jax.random.normal(kx, (2, 13, D), dtype=jnp.float32)
    out_r = positional_wise_feed_forward(xr, w1, b1, w2, b2, gamma, beta,
                                         compute_dtype=jnp.float32)
    out_r = jax.block_until_ready(out_r)
    ref_r = _reference(xr, w1, b1, w2, b2, gamma, beta)
    assert out_r.shape == (2, 13, D)
    assert jnp.allclose(out_r, ref_r, atol=1e-4, rtol=1e-4), "ragged path mismatch"

    print("KERNEL_OK")
</pallas_src>

<mosaic_0001>
module attributes {stable_mosaic.version = 11 : i64} {
  func.func @_ffn_kernel_resident(%arg0: i32, %arg1: memref<8x32xf32, #tpu.memory_space<vmem>>, %arg2: memref<32x64xf32, #tpu.memory_space<vmem>>, %arg3: memref<1x64xf32, #tpu.memory_space<vmem>>, %arg4: memref<64x32xf32, #tpu.memory_space<vmem>>, %arg5: memref<1x32xf32, #tpu.memory_space<vmem>>, %arg6: memref<1x32xf32, #tpu.memory_space<vmem>>, %arg7: memref<1x32xf32, #tpu.memory_space<vmem>>, %arg8: memref<8x32xf32, #tpu.memory_space<vmem>>) attributes {dimension_semantics = [#tpu.dimension_semantics<parallel>], iteration_bounds = array<i64: 2>, scalar_prefetch = 0 : i64, scratch_operands = 0 : i64, tpu.core_type = #tpu.core_type<tc>, window_params = [{transform_indices = @transform_0, window_bounds = array<i64: 8, 32>}, {pipeline_mode = #tpu.pipeline_mode<synchronous>, transform_indices = @transform_1, window_bounds = array<i64: 32, 64>}, {pipeline_mode = #tpu.pipeline_mode<synchronous>, transform_indices = @transform_2, window_bounds = array<i64: 1, 64>}, {pipeline_mode = #tpu.pipeline_mode<synchronous>, transform_indices = @transform_3, window_bounds = array<i64: 64, 32>}, {pipeline_mode = #tpu.pipeline_mode<synchronous>, transform_indices = @transform_4, window_bounds = array<i64: 1, 32>}, {pipeline_mode = #tpu.pipeline_mode<synchronous>, transform_indices = @transform_5, window_bounds = array<i64: 1, 32>}, {pipeline_mode = #tpu.pipeline_mode<synchronous>, transform_indices = @transform_6, window_bounds = array<i64: 1, 32>}, {transform_indices = @transform_7, window_bounds = array<i64: 8, 32>}]} {
    %c0 = arith.constant 0 : index
    %c0_0 = arith.constant 0 : index
    %0 = vector.load %arg1[%c0, %c0_0] : memref<8x32xf32, #tpu.memory_space<vmem>>, vector<8x32xf32>
    %c0_1 = arith.constant 0 : index
    %c0_2 = arith.constant 0 : index
    %1 = vector.load %arg2[%c0_1, %c0_2] : memref<32x64xf32, #tpu.memory_space<vmem>>, vector<32x64xf32>
    %cst = arith.constant dense<0.000000e+00> : vector<8x64xf32>
    %2 = tpu.matmul %0, %1, %cst {dimension_numbers = #tpu.dot_dimension_numbers<[1], [0], [0], [1], [0, 0, 1, 1], [], []>} : vector<8x32xf32>, vector<32x64xf32>, vector<8x64xf32> -> vector<8x64xf32>
    %c0_3 = arith.constant 0 : index
    %c0_4 = arith.constant 0 : index
    %3 = vector.load %arg3[%c0_3, %c0_4] : memref<1x64xf32, #tpu.memory_space<vmem>>, vector<1x64xf32>
    %4 = vector.broadcast %3 : vector<1x64xf32> to vector<8x64xf32>
    %5 = arith.addf %2, %4 : vector<8x64xf32>
    %cst_5 = arith.constant 0.000000e+00 : f32
    %6 = vector.broadcast %cst_5 : f32 to vector<8x64xf32>
    %7 = arith.maximumf %5, %6 : vector<8x64xf32>
    %c0_6 = arith.constant 0 : index
    %c0_7 = arith.constant 0 : index
    %8 = vector.load %arg4[%c0_6, %c0_7] : memref<64x32xf32, #tpu.memory_space<vmem>>, vector<64x32xf32>
    %cst_8 = arith.constant dense<0.000000e+00> : vector<8x32xf32>
    %9 = tpu.matmul %7, %8, %cst_8 {dimension_numbers = #tpu.dot_dimension_numbers<[1], [0], [0], [1], [0, 0, 1, 1], [], []>} : vector<8x64xf32>, vector<64x32xf32>, vector<8x32xf32> -> vector<8x32xf32>
    %10 = arith.addf %0, %9 : vector<8x32xf32>
    %c0_9 = arith.constant 0 : index
    %c0_10 = arith.constant 0 : index
    %11 = vector.load %arg5[%c0_9, %c0_10] : memref<1x32xf32, #tpu.memory_space<vmem>>, vector<1x32xf32>
    %12 = vector.broadcast %11 : vector<1x32xf32> to vector<8x32xf32>
    %13 = arith.addf %10, %12 : vector<8x32xf32>
    %cst_11 = arith.constant dense<0.000000e+00> : vector<8xf32>
    %14 = vector.multi_reduction <add>, %13, %cst_11 [1] : vector<8x32xf32> to vector<8xf32>
    %15 = vector.shape_cast %14 : vector<8xf32> to vector<8x1xf32>
    %cst_12 = arith.constant 3.200000e+01 : f32
    %16 = vector.broadcast %cst_12 : f32 to vector<8x1xf32>
    %17 = arith.divf %15, %16 : vector<8x1xf32>
    %18 = vector.broadcast %17 : vector<8x1xf32> to vector<8x32xf32>
    %19 = arith.subf %13, %18 : vector<8x32xf32>
    %20 = arith.mulf %19, %19 : vector<8x32xf32>
    %cst_13 = arith.constant dense<0.000000e+00> : vector<8xf32>
    %21 = vector.multi_reduction <add>, %20, %cst_13 [1] : vector<8x32xf32> to vector<8xf32>
    %22 = vector.shape_cast %21 : vector<8xf32> to vector<8x1xf32>
    %cst_14 = arith.constant 3.200000e+01 : f32
    %23 = vector.broadcast %cst_14 : f32 to vector<8x1xf32>
    %24 = arith.divf %22, %23 : vector<8x1xf32>
    %cst_15 = arith.constant 9.99999974E-6 : f32
    %25 = vector.broadcast %cst_15 : f32 to vector<8x1xf32>
    %26 = arith.addf %24, %25 : vector<8x1xf32>
    %27 = math.rsqrt %26 : vector<8x1xf32>
    %28 = vector.broadcast %27 : vector<8x1xf32> to vector<8x32xf32>
    %29 = arith.mulf %19, %28 : vector<8x32xf32>
    %c0_16 = arith.constant 0 : index
    %c0_17 = arith.constant 0 : index
    %30 = vector.load %arg6[%c0_16, %c0_17] : memref<1x32xf32, #tpu.memory_space<vmem>>, vector<1x32xf32>
    %31 = vector.broadcast %30 : vector<1x32xf32> to vector<8x32xf32>
    %32 = arith.mulf %29, %31 : vector<8x32xf32>
    %c0_18 = arith.constant 0 : index
    %c0_19 = arith.constant 0 : index
    %33 = vector.load %arg7[%c0_18, %c0_19] : memref<1x32xf32, #tpu.memory_space<vmem>>, vector<1x32xf32>
    %34 = vector.broadcast %33 : vector<1x32xf32> to vector<8x32xf32>
    %35 = arith.addf %32, %34 : vector<8x32xf32>
    %c0_20 = arith.constant 0 : index
    %c0_21 = arith.constant 0 : index
    %36 = vector.load %arg8[%c0_20, %c0_21] : memref<8x32xf32, #tpu.memory_space<vmem>>, vector<8x32xf32>
    tpu.vector_store %arg8[%c0_20, %c0_21], %35 {strides = array<i32>} : memref<8x32xf32, #tpu.memory_space<vmem>>, vector<8x32xf32>,
    return
  }
  func.func @transform_0(%arg0: i32) -> (i32, i32) {
    %c0_i32 = arith.constant 0 : i32
    %c0_i32_0 = arith.constant 0 : i32
    return %arg0, %c0_i32 : i32, i32
  }
  func.func @transform_1(%arg0: i32) -> (i32, i32) {
    %c0_i32 = arith.constant 0 : i32
    %c0_i32_0 = arith.constant 0 : i32
    %c0_i32_1 = arith.constant 0 : i32
    return %c0_i32, %c0_i32_0 : i32, i32
  }
  func.func @transform_2(%arg0: i32) -> (i32, i32) {
    %c0_i32 = arith.constant 0 : i32
    %c0_i32_0 = arith.constant 0 : i32
    %c0_i32_1 = arith.constant 0 : i32
    return %c0_i32, %c0_i32_0 : i32, i32
  }
  func.func @transform_3(%arg0: i32) -> (i32, i32) {
    %c0_i32 = arith.constant 0 : i32
    %c0_i32_0 = arith.constant 0 : i32
    %c0_i32_1 = arith.constant 0 : i32
    return %c0_i32, %c0_i32_0 : i32, i32
  }
  func.func @transform_4(%arg0: i32) -> (i32, i32) {
    %c0_i32 = arith.constant 0 : i32
    %c0_i32_0 = arith.constant 0 : i32
    %c0_i32_1 = arith.constant 0 : i32
    return %c0_i32, %c0_i32_0 : i32, i32
  }
  func.func @transform_5(%arg0: i32) -> (i32, i32) {
    %c0_i32 = arith.constant 0 : i32
    %c0_i32_0 = arith.constant 0 : i32
    %c0_i32_1 = arith.constant 0 : i32
    return %c0_i32, %c0_i32_0 : i32, i32
  }
  func.func @transform_6(%arg0: i32) -> (i32, i32) {
    %c0_i32 = arith.constant 0 : i32
    %c0_i32_0 = arith.constant 0 : i32
    %c0_i32_1 = arith.constant 0 : i32
    return %c0_i32, %c0_i32_0 : i32, i32
  }
  func.func @transform_7(%arg0: i32) -> (i32, i32) {
    %c0_i32 = arith.constant 0 : i32
    %c0_i32_0 = arith.constant 0 : i32
    return %arg0, %c0_i32 : i32, i32
  }
}

module attributes {stable_mosaic.version = 11 : i64} {
  func.func @_ffn_kernel_resident(%arg0: i32, %arg1: memref<8x32xf32, #tpu.memory_space<vmem>>, %arg2: memref<32x64xf32, #tpu.memory_space<vmem>>, %arg3: memref<1x64xf32, #tpu.memory_space<vmem>>, %arg4: memref<64x32xf32, #tpu.memory_space<vmem>>, %arg5: memref<1x32xf32, #tpu.memory_space<vmem>>, %arg6: memref<1x32xf32, #tpu.memory_space<vmem>>, %arg7: memref<1x32xf32, #tpu.memory_space<vmem>>, %arg8: memref<8x32xf32, #tpu.memory_space<vmem>>) attributes {dimension_semantics = [#tpu.dimension_semantics<parallel>], iteration_bounds = array<i64: 2>, scalar_prefetch = 0 : i64, scratch_operands = 0 : i64, tpu.core_type = #tpu.core_type<tc>, window_params = [{transform_indices = @transform_0, window_bounds = array<i64: 8, 32>}, {pipeline_mode = #tpu.pipeline_mode<synchronous>, transform_indices = @transform_1, window_bounds = array<i64: 32, 64>}, {pipeline_mode = #tpu.pipeline_mode<synchronous>, transform_indices = @transform_2, window_bounds = array<i64: 1, 64>}, {pipeline_mode = #tpu.pipeline_mode<synchronous>, transform_indices = @transform_3, window_bounds = array<i64: 64, 32>}, {pipeline_mode = #tpu.pipeline_mode<synchronous>, transform_indices = @transform_4, window_bounds = array<i64: 1, 32>}, {pipeline_mode = #tpu.pipeline_mode<synchronous>, transform_indices = @transform_5, window_bounds = array<i64: 1, 32>}, {pipeline_mode = #tpu.pipeline_mode<synchronous>, transform_indices = @transform_6, window_bounds = array<i64: 1, 32>}, {transform_indices = @transform_7, window_bounds = array<i64: 8, 32>}]} {
    %c0 = arith.constant 0 : index
    %c0_0 = arith.constant 0 : index
    %0 = vector.load %arg1[%c0, %c0_0] : memref<8x32xf32, #tpu.memory_space<vmem>>, vector<8x32xf32>
    %c0_1 = arith.constant 0 : index
    %c0_2 = arith.constant 0 : index
    %1 = vector.load %arg2[%c0_1, %c0_2] : memref<32x64xf32, #tpu.memory_space<vmem>>, vector<32x64xf32>
    %cst = arith.constant dense<0.000000e+00> : vector<8x64xf32>
    %2 = tpu.matmul %0, %1, %cst {dimension_numbers = #tpu.dot_dimension_numbers<[1], [0], [0], [1], [0, 0, 1, 1], [], []>} : vector<8x32xf32>, vector<32x64xf32>, vector<8x64xf32> -> vector<8x64xf32>
    %c0_3 = arith.constant 0 : index
    %c0_4 = arith.constant 0 : index
    %3 = vector.load %arg3[%c0_3, %c0_4] : memref<1x64xf32, #tpu.memory_space<vmem>>, vector<1x64xf32>
    %4 = vector.broadcast %3 : vector<1x64xf32> to vector<8x64xf32>
    %5 = arith.addf %2, %4 : vector<8x64xf32>
    %cst_5 = arith.constant 0.000000e+00 : f32
    %6 = vector.broadcast %cst_5 : f32 to vector<8x64xf32>
    %7 = arith.maximumf %5, %6 : vector<8x64xf32>
    %c0_6 = arith.constant 0 : index
    %c0_7 = arith.constant 0 : index
    %8 = vector.load %arg4[%c0_6, %c0_7] : memref<64x32xf32, #tpu.memory_space<vmem>>, vector<64x32xf32>
    %cst_8 = arith.constant dense<0.000000e+00> : vector<8x32xf32>
    %9 = tpu.matmul %7, %8, %cst_8 {dimension_numbers = #tpu.dot_dimension_numbers<[1], [0], [0], [1], [0, 0, 1, 1], [], []>} : vector<8x64xf32>, vector<64x32xf32>, vector<8x32xf32> -> vector<8x32xf32>
    %10 = arith.addf %0, %9 : vector<8x32xf32>
    %c0_9 = arith.constant 0 : index
    %c0_10 = arith.constant 0 : index
    %11 = vector.load %arg5[%c0_9, %c0_10] : memref<1x32xf32, #tpu.memory_space<vmem>>, vector<1x32xf32>
    %12 = vector.broadcast %11 : vector<1x32xf32> to vector<8x32xf32>
    %13 = arith.addf %10, %12 : vector<8x32xf32>
    %cst_11 = arith.constant dense<0.000000e+00> : vector<8xf32>
    %14 = vector.multi_reduction <add>, %13, %cst_11 [1] : vector<8x32xf32> to vector<8xf32>
    %15 = vector.shape_cast %14 : vector<8xf32> to vector<8x1xf32>
    %cst_12 = arith.constant 3.200000e+01 : f32
    %16 = vector.broadcast %cst_12 : f32 to vector<8x1xf32>
    %17 = arith.divf %15, %16 : vector<8x1xf32>
    %18 = vector.broadcast %17 : vector<8x1xf32> to vector<8x32xf32>
    %19 = arith.subf %13, %18 : vector<8x32xf32>
    %20 = arith.mulf %19, %19 : vector<8x32xf32>
    %cst_13 = arith.constant dense<0.000000e+00> : vector<8xf32>
    %21 = vector.multi_reduction <add>, %20, %cst_13 [1] : vector<8x32xf32> to vector<8xf32>
    %22 = vector.shape_cast %21 : vector<8xf32> to vector<8x1xf32>
    %cst_14 = arith.constant 3.200000e+01 : f32
    %23 = vector.broadcast %cst_14 : f32 to vector<8x1xf32>
    %24 = arith.divf %22, %23 : vector<8x1xf32>
    %cst_15 = arith.constant 9.99999974E-6 : f32
    %25 = vector.broadcast %cst_15 : f32 to vector<8x1xf32>
    %26 = arith.addf %24, %25 : vector<8x1xf32>
    %27 = math.rsqrt %26 : vector<8x1xf32>
    %28 = vector.broadcast %27 : vector<8x1xf32> to vector<8x32xf32>
    %29 = arith.mulf %19, %28 : vector<8x32xf32>
    %c0_16 = arith.constant 0 : index
    %c0_17 = arith.constant 0 : index
    %30 = vector.load %arg6[%c0_16, %c0_17] : memref<1x32xf32, #tpu.memory_space<vmem>>, vector<1x32xf32>
    %31 = vector.broadcast %30 : vector<1x32xf32> to vector<8x32xf32>
    %32 = arith.mulf %29, %31 : vector<8x32xf32>
    %c0_18 = arith.constant 0 : index
    %c0_19 = arith.constant 0 : index
    %33 = vector.load %arg7[%c0_18, %c0_19] : memref<1x32xf32, #tpu.memory_space<vmem>>, vector<1x32xf32>
    %34 = vector.broadcast %33 : vector<1x32xf32> to vector<8x32xf32>
    %35 = arith.addf %32, %34 : vector<8x32xf32>
    %c0_20 = arith.constant 0 : index
    %c0_21 = arith.constant 0 : index
    %36 = vector.load %arg8[%c0_20, %c0_21] : memref<8x32xf32, #tpu.memory_space<vmem>>, vector<8x32xf32>
    tpu.vector_store %arg8[%c0_20, %c0_21], %35 {strides = array<i32>} : memref<8x32xf32, #tpu.memory_space<vmem>>, vector<8x32xf32>,
    return
  }
  func.func @transform_0(%arg0: i32) -> (i32, i32) {
    %c0_i32 = arith.constant 0 : i32
    %c0_i32_0 = arith.constant 0 : i32
    return %arg0, %c0_i32 : i32, i32
  }
  func.func @transform_1(%arg0: i32) -> (i32, i32) {
    %c0_i32 = arith.constant 0 : i32
    %c0_i32_0 = arith.constant 0 : i32
    %c0_i32_1 = arith.constant 0 : i32
    return %c0_i32, %c0_i32_0 : i32, i32
  }
  func.func @transform_2(%arg0: i32) -> (i32, i32) {
    %c0_i32 = arith.constant 0 : i32
    %c0_i32_0 = arith.constant 0 : i32
    %c0_i32_1 = arith.constant 0 : i32
    return %c0_i32, %c0_i32_0 : i32, i32
  }
  func.func @transform_3(%arg0: i32) -> (i32, i32) {
    %c0_i32 = arith.constant 0 : i32
    %c0_i32_0 = arith.constant 0 : i32
    %c0_i32_1 = arith.constant 0 : i32
    return %c0_i32, %c0_i32_0 : i32, i32
  }
  func.func @transform_4(%arg0: i32) -> (i32, i32) {
    %c0_i32 = arith.constant 0 : i32
    %c0_i32_0 = arith.constant 0 : i32
    %c0_i32_1 = arith.constant 0 : i32
    return %c0_i32, %c0_i32_0 : i32, i32
  }
  func.func @transform_5(%arg0: i32) -> (i32, i32) {
    %c0_i32 = arith.constant 0 : i32
    %c0_i32_0 = arith.constant 0 : i32
    %c0_i32_1 = arith.constant 0 : i32
    return %c0_i32, %c0_i32_0 : i32, i32
  }
  func.func @transform_6(%arg0: i32) -> (i32, i32) {
    %c0_i32 = arith.constant 0 : i32
    %c0_i32_0 = arith.constant 0 : i32
    %c0_i32_1 = arith.constant 0 : i32
    return %c0_i32, %c0_i32_0 : i32, i32
  }
  func.func @transform_7(%arg0: i32) -> (i32, i32) {
    %c0_i32 = arith.constant 0 : i32
    %c0_i32_0 = arith.constant 0 : i32
    return %arg0, %c0_i32 : i32, i32
  }
}

</mosaic_0001>

<llo_original>
// kernel: tpu_custom_call.1
$region0: #{tpu_custom_call.1}
  #allocation0 [shape = 'u32[]', space=smem, size = 0x4, offset = 0x4, fixed_abs, tag = 'smem constant byte address 0x4 - core index']
  #allocation1 [shape = 'u32[144,128]{1,0:T(1,128)}', space=vmem, size = 0x12000, scoped, tag = 'internal scratch']
  %s0 = inlined_call_operand.vmem [shape: f32[16,32], index: 0, kind: input, shape index: {}]
  %s1 = inlined_call_operand.vmem [shape: f32[32,64], index: 1, kind: input, shape index: {}]
  %s2 = inlined_call_operand.vmem [shape: f32[1,64], index: 2, kind: input, shape index: {}]
  %s3 = inlined_call_operand.vmem [shape: f32[64,32], index: 3, kind: input, shape index: {}]
  %s4 = inlined_call_operand.vmem [shape: f32[1,32], index: 4, kind: input, shape index: {}]
  %s5 = inlined_call_operand.vmem [shape: f32[1,32], index: 5, kind: input, shape index: {}]
  %s6 = inlined_call_operand.vmem [shape: f32[1,32], index: 6, kind: input, shape index: {}]
  %s7 = inlined_call_operand.hbm [shape: f32[16,32], index: 7, kind: output, shape index: {}]
  %s8 = sld [smem:[#allocation0]]
  $region61: #{tpu_custom_call.1} parent=0
    _
  %s10 = ssub.s32 1, %s8
  %s11 = scalar_select 0, %s10, %s8
  $region1: #{tpu_custom_call.1} parent=0
    #allocation2 [shape = 'u8[8192]{0}', space=vmem, size = 0x2000, scoped, tag = 'output window, operand 0']
    #allocation3 [shape = 's32[2]{0}', space=sflag, size = 0x8, scoped, tag = 'scoped memory for tpu_custom_call.1']
    %12 = vsyncpa [#allocation3], 0
    %s13 = scalar_lea.sflag [#allocation3], 1
    %14 = vsyncpa %s13, 0
    loop: start=0, step=1, limit=4
    $region2: #{tpu_custom_call.1} parent=1 // loop_pre_header
      _
    $region3: #{tpu_custom_call.1} parent=1 // loop_header
      %s16 = sphi 0, %s20
      %p17 = scmp.ge.s32.totalorder %s16, 4
      %s26 = sphi 0, %s28
      %s29 = sphi 0, %s26
      %s30 = sphi 0, %s29
      %s46 = sphi 0, %s30
      %s50 = sphi 0, %s50
      %s52 = sphi 0, %s50
      %s53 = sphi 0, %s52
      %s67 = sphi 0, %s53
      %s71 = sphi 0, %s71
      %s73 = sphi 0, %s71
      %s74 = sphi 0, %s73
      %s88 = sphi 0, %s74
      %s92 = sphi 0, %s92
      %s94 = sphi 0, %s92
      %s95 = sphi 0, %s94
      %s109 = sphi 0, %s95
      %s113 = sphi 0, %s113
      %s115 = sphi 0, %s113
      %s116 = sphi 0, %s115
      %s130 = sphi 0, %s116
      %s134 = sphi 0, %s134
      %s136 = sphi 0, %s134
      %s137 = sphi 0, %s136
      %s151 = sphi 0, %s137
      %s155 = sphi 0, %s155
      %s157 = sphi 0, %s155
      %s158 = sphi 0, %s157
      %s172 = sphi 0, %s158
      %s178 = sphi 0, %s180
      %s181 = sphi 0, %s178
      %s182 = sphi 0, %s181
      %s198 = sphi 0, %s182
    $region4: #{tpu_custom_call.1} parent=1 // loop_header_branch
      %19 = sbr.rel (%p17) target = $region8
    $region5: #{tpu_custom_call.1} parent=1 // loop_body
      %s21 = ssub.s32 %s16, 1
      %s22 = ssub.s32 %s16, 2
      %s23 = sadd.s32 %s16, 1
      %s24 = ssub.s32 %s16, %s23
      %p25 = scmp.eq.s32.totalorder %s24, 0
      %s27 = sadd.s32 %s26, 1
      %s28 = scalar_select %p25, %s26, %s27
      %p31 = pneg %p25
      %p32 = scmp.eq.s32.totalorder %s16, 1
      %p33 = por %p31, %p32
      %p34 = scmp.ne.s32.totalorder %s26, %s29
      %p35 = scmp.eq.s32.totalorder %s16, 0
      %p36 = por %p34, %p35
      %p37 = scmp.ne.s32.totalorder %s26, %s29
      %p38 = scmp.eq.s32.totalorder %s21, 1
      %p39 = por %p37, %p38
      %p40 = scmp.ne.s32.totalorder %s29, %s30
      %p41 = scmp.eq.s32.totalorder %s21, 0
      %p42 = por %p40, %p41
      %p43 = scmp.ne.s32.totalorder %s29, %s30
      %p44 = scmp.eq.s32.totalorder %s22, 1
      %p45 = por %p43, %p44
      %p47 = scmp.ne.s32.totalorder %s30, %s46
      %p48 = scmp.eq.s32.totalorder %s22, 0
      %p49 = por %p47, %p48
      %s51 = sadd.s32 %s50, 1
      %p54 = scmp.eq.s32.totalorder %s16, 1
      %p55 = scmp.ne.s32.totalorder %s50, %s52
      %p56 = scmp.eq.s32.totalorder %s16, 0
      %p57 = por %p55, %p56
      %p58 = scmp.ne.s32.totalorder %s50, %s52
      %p59 = scmp.eq.s32.totalorder %s21, 1
      %p60 = por %p58, %p59
      %p61 = scmp.ne.s32.totalorder %s52, %s53
      %p62 = scmp.eq.s32.totalorder %s21, 0
      %p63 = por %p61, %p62
      %p64 = scmp.ne.s32.totalorder %s52, %s53
      %p65 = scmp.eq.s32.totalorder %s22, 1
      %p66 = por %p64, %p65
      %p68 = scmp.ne.s32.totalorder %s53, %s67
      %p69 = scmp.eq.s32.totalorder %s22, 0
      %p70 = por %p68, %p69
      %s72 = sadd.s32 %s71, 1
      %p75 = scmp.eq.s32.totalorder %s16, 1
      %p76 = scmp.ne.s32.totalorder %s71, %s73
      %p77 = scmp.eq.s32.totalorder %s16, 0
      %p78 = por %p76, %p77
      %p79 = scmp.ne.s32.totalorder %s71, %s73
      %p80 = scmp.eq.s32.totalorder %s21, 1
      %p81 = por %p79, %p80
      %p82 = scmp.ne.s32.totalorder %s73, %s74
      %p83 = scmp.eq.s32.totalorder %s21, 0
      %p84 = por %p82, %p83
      %p85 = scmp.ne.s32.totalorder %s73, %s74
      %p86 = scmp.eq.s32.totalorder %s22, 1
      %p87 = por %p85, %p86
      %p89 = scmp.ne.s32.totalorder %s74, %s88
      %p90 = scmp.eq.s32.totalorder %s22, 0
      %p91 = por %p89, %p90
      %s93 = sadd.s32 %s92, 1
      %p96 = scmp.eq.s32.totalorder %s16, 1
      %p97 = scmp.ne.s32.totalorder %s92, %s94
      %p98 = scmp.eq.s32.totalorder %s16, 0
      %p99 = por %p97, %p98
      %p100 = scmp.ne.s32.totalorder %s92, %s94
      %p101 = scmp.eq.s32.totalorder %s21, 1
      %p102 = por %p100, %p101
      %p103 = scmp.ne.s32.totalorder %s94, %s95
      %p104 = scmp.eq.s32.totalorder %s21, 0
      %p105 = por %p103, %p104
      %p106 = scmp.ne.s32.totalorder %s94, %s95
      %p107 = scmp.eq.s32.totalorder %s22, 1
      %p108 = por %p106, %p107
      %p110 = scmp.ne.s32.totalorder %s95, %s109
      %p111 = scmp.eq.s32.totalorder %s22, 0
      %p112 = por %p110, %p111
      %s114 = sadd.s32 %s113, 1
      %p117 = scmp.eq.s32.totalorder %s16, 1
      %p118 = scmp.ne.s32.totalorder %s113, %s115
      %p119 = scmp.eq.s32.totalorder %s16, 0
      %p120 = por %p118, %p119
      %p121 = scmp.ne.s32.totalorder %s113, %s115
      %p122 = scmp.eq.s32.totalorder %s21, 1
      %p123 = por %p121, %p122
      %p124 = scmp.ne.s32.totalorder %s115, %s116
      %p125 = scmp.eq.s32.totalorder %s21, 0
      %p126 = por %p124, %p125
      %p127 = scmp.ne.s32.totalorder %s115, %s116
      %p128 = scmp.eq.s32.totalorder %s22, 1
      %p129 = por %p127, %p128
      %p131 = scmp.ne.s32.totalorder %s116, %s130
      %p132 = scmp.eq.s32.totalorder %s22, 0
      %p133 = por %p131, %p132
      %s135 = sadd.s32 %s134, 1
      %p138 = scmp.eq.s32.totalorder %s16, 1
      %p139 = scmp.ne.s32.totalorder %s134, %s136
      %p140 = scmp.eq.s32.totalorder %s16, 0
      %p141 = por %p139, %p140
      %p142 = scmp.ne.s32.totalorder %s134, %s136
      %p143 = scmp.eq.s32.totalorder %s21, 1
      %p144 = por %p142, %p143
      %p145 = scmp.ne.s32.totalorder %s136, %s137
      %p146 = scmp.eq.s32.totalorder %s21, 0
      %p147 = por %p145, %p146
      %p148 = scmp.ne.s32.totalorder %s136, %s137
      %p149 = scmp.eq.s32.totalorder %s22, 1
      %p150 = por %p148, %p149
      %p152 = scmp.ne.s32.totalorder %s137, %s151
      %p153 = scmp.eq.s32.totalorder %s22, 0
      %p154 = por %p152, %p153
      %s156 = sadd.s32 %s155, 1
      %p159 = scmp.eq.s32.totalorder %s16, 1
      %p160 = scmp.ne.s32.totalorder %s155, %s157
      %p161 = scmp.eq.s32.totalorder %s16, 0
      %p162 = por %p160, %p161
      %p163 = scmp.ne.s32.totalorder %s155, %s157
      %p164 = scmp.eq.s32.totalorder %s21, 1
      %p165 = por %p163, %p164
      %p166 = scmp.ne.s32.totalorder %s157, %s158
      %p167 = scmp.eq.s32.totalorder %s21, 0
      %p168 = por %p166, %p167
      %p169 = scmp.ne.s32.totalorder %s157, %s158
      %p170 = scmp.eq.s32.totalorder %s22, 1
      %p171 = por %p169, %p170
      %p173 = scmp.ne.s32.totalorder %s158, %s172
      %p174 = scmp.eq.s32.totalorder %s22, 0
      %p175 = por %p173, %p174
      %s176 = ssub.s32 %s16, %s23
      %p177 = scmp.eq.s32.totalorder %s176, 0
      %s179 = sadd.s32 %s178, 1
      %s180 = scalar_select %p177, %s178, %s179
      %p183 = pneg %p177
      %p184 = scmp.eq.s32.totalorder %s16, 1
      %p185 = por %p183, %p184
      %p186 = scmp.ne.s32.totalorder %s178, %s181
      %p187 = scmp.eq.s32.totalorder %s16, 0
      %p188 = por %p186, %p187
      %p189 = scmp.ne.s32.totalorder %s178, %s181
      %p190 = scmp.eq.s32.totalorder %s21, 1
      %p191 = por %p189, %p190
      %p192 = scmp.ne.s32.totalorder %s181, %s182
      %p193 = scmp.eq.s32.totalorder %s21, 0
      %p194 = por %p192, %p193
      %p195 = scmp.ne.s32.totalorder %s181, %s182
      %p196 = scmp.eq.s32.totalorder %s22, 1
      %p197 = por %p195, %p196
      %p199 = scmp.ne.s32.totalorder %s182, %s198
      %p200 = scmp.eq.s32.totalorder %s22, 0
      %p201 = por %p199, %p200
      %p202 = scmp.le.s32.totalorder 1, %s16
      %p203 = scmp.lt.s32.totalorder %s16, 3
      %p204 = pnand %p202, %p203
      %p205 = pneg %p204
      // Predicated region
      $region9: #{tpu_custom_call.1} parent=5 // pred_check
        _
      $region10: #{tpu_custom_call.1} parent=5 // pred_check_branch
        %207 = sbr.rel (%p204) target = $region12
      $region11: #{tpu_custom_call.1} parent=5 // pred_region
        %s208 = ssub.s32 %s16, 1
        // Predicated region
        $region13: #{tpu_custom_call.1} parent=11 // pred_check
          %p209 = pneg %p63
        $region14: #{tpu_custom_call.1} parent=11 // pred_check_branch
          %211 = sbr.rel (%p209) target = $region16
        $region15: #{tpu_custom_call.1} parent=11 // pred_region
          _
        $region16: #{tpu_custom_call.1} parent=11 // pred_fallthru
          _
        // Predicated region
        $region17: #{tpu_custom_call.1} parent=11 // pred_check
          %p212 = pneg %p84
        $region18: #{tpu_custom_call.1} parent=11 // pred_check_branch
          %214 = sbr.rel (%p212) target = $region20
        $region19: #{tpu_custom_call.1} parent=11 // pred_region
          _
        $region20: #{tpu_custom_call.1} parent=11 // pred_fallthru
          _
        // Predicated region
        $region21: #{tpu_custom_call.1} parent=11 // pred_check
          %p215 = pneg %p105
        $region22: #{tpu_custom_call.1} parent=11 // pred_check_branch
          %217 = sbr.rel (%p215) target = $region24
        $region23: #{tpu_custom_call.1} parent=11 // pred_region
          _
        $region24: #{tpu_custom_call.1} parent=11 // pred_fallthru
          _
        // Predicated region
        $region25: #{tpu_custom_call.1} parent=11 // pred_check
          %p218 = pneg %p126
        $region26: #{tpu_custom_call.1} parent=11 // pred_check_branch
          %220 = sbr.rel (%p218) target = $region28
        $region27: #{tpu_custom_call.1} parent=11 // pred_region
          _
        $region28: #{tpu_custom_call.1} parent=11 // pred_fallthru
          _
        // Predicated region
        $region29: #{tpu_custom_call.1} parent=11 // pred_check
          %p221 = pneg %p147
        $region30: #{tpu_custom_call.1} parent=11 // pred_check_branch
          %223 = sbr.rel (%p221) target = $region32
        $region31: #{tpu_custom_call.1} parent=11 // pred_region
          _
        $region32: #{tpu_custom_call.1} parent=11 // pred_fallthru
          _
        // Predicated region
        $region33: #{tpu_custom_call.1} parent=11 // pred_check
          %p224 = pneg %p168
        $region34: #{tpu_custom_call.1} parent=11 // pred_check_branch
          %226 = sbr.rel (%p224) target = $region36
        $region35: #{tpu_custom_call.1} parent=11 // pred_region
          _
        $region36: #{tpu_custom_call.1} parent=11 // pred_fallthru
          _
      $region12: #{tpu_custom_call.1} parent=5 // pred_fallthru
        _
      %p227 = scmp.lt.s32.totalorder %s16, 2
      // Predicated region
      $region37: #{tpu_custom_call.1} parent=5 // pred_check
        %p228 = pneg %p227
      $region38: #{tpu_custom_call.1} parent=5 // pred_check_branch
        %230 = sbr.rel (%p228) target = $region40
      $region39: #{tpu_custom_call.1} parent=5 // pred_region
        // Predicated region
        $region41: #{tpu_custom_call.1} parent=39 // pred_check
          %p231 = pneg %p36
        $region42: #{tpu_custom_call.1} parent=39 // pred_check_branch
          %233 = sbr.rel (%p231) target = $region44
        $region43: #{tpu_custom_call.1} parent=39 // pred_region
          %p234 = scmp.lt.s32.totalorder %s16, 1
          %s235 = scalar_select %p234, %s16, 1
          %s236 = smul.addr %s235, 8
          %s237 = scalar_lea.vmem %s0, %s236
        $region44: #{tpu_custom_call.1} parent=39 // pred_fallthru
          _
      $region40: #{tpu_custom_call.1} parent=5 // pred_fallthru
        _
      %p238 = scmp.le.s32.totalorder 1, %s16
      %p239 = scmp.lt.s32.totalorder %s16, 3
      %p240 = pnand %p238, %p239
      %p241 = pneg %p240
      // Predicated region
      $region45: #{tpu_custom_call.1} parent=5 // pred_check
        _
      $region46: #{tpu_custom_call.1} parent=5 // pred_check_branch
        %243 = sbr.rel (%p240) target = $region48
      $region47: #{tpu_custom_call.1} parent=5 // pred_region
        %s244 = ssub.s32 %s16, 1
        %p245 = scmp.lt.s32.totalorder %s21, 1
        %s246 = scalar_select %p245, %s21, 1
        %s247 = smul.addr %s246, 8
        %s248 = scalar_lea.vmem %s0, %s247
        %p249 = pneg %p42
        %p250 = pneg %p39
        %p251 = pneg %p63
        %p252 = pneg %p60
        %p253 = pneg %p84
        %p254 = pneg %p81
        %p255 = pneg %p105
        %p256 = pneg %p102
        %p257 = pneg %p126
        %p258 = pneg %p123
        %p259 = pneg %p147
        %p260 = pneg %p144
        %p261 = pneg %p168
        %p262 = pneg %p165
        %p263 = pneg %p194
        %p264 = pneg %p191
        %s265 = sand.u32 %s181, 1
        %s266 = scalar_lea.sflag [#allocation3], %s265
        %s267 = sand.u32 %s181, 1
        %s268 = smul.addr %s267, 8
        %s269 = scalar_lea.vmem [#allocation2], %s268
        %p270 = scmp.lt.s32.totalorder %s21, 1
        %s271 = scalar_select %p270, %s21, 1
        %s272 = smul.addr %s271, 8
        %s273 = scalar_lea.vmem %s0, %s272
        %v274 = vld [vmem:[%s273] sm:$0xff]
        %v275 = vld [vmem:[%s1] sm:$0xff]
        %v276 = vld [vmem:[%s1 + $0x8] sm:$0xff]
        %v277 = vld [vmem:[%s1 + $0x10] sm:$0xff]
        %v278 = vld [vmem:[%s1 + $0x18] sm:$0xff]
        %v279 = vld [vmem:[%s2] sm:$0x1]
        %v281 = vlaneseq
        %v282 = vshrl.u32 %v281, 7
        %v283 = vsub.s32 0, %v282
        %v284 = vrot.slane %v279, %v283
        %vm286 = vcmask 261120
        %v288 = vsel %vm286, %v274, 0
        %290 = vmatprep.subr.mxu0 0.0
        %291 = vmatpush1.msra.mxu0 0.0
        %292 = vmatprep.subr.mxu0 0.0
        %293 = vmatpush1.msra.mxu0 0.0
        %294 = vmatprep.subr.mxu0 0.0
        %295 = vmatpush1.msra.mxu0 0.0
        %296 = vmatprep.subr.mxu0 0.0
        %297 = vmatpush1.msra.mxu0 0.0
        %298 = vmatprep.subr.mxu0 0.0
        %299 = vmatpush1.msra.mxu0 0.0
        %300 = vmatprep.subr.mxu0 0.0
        %301 = vmatpush1.msra.mxu0 0.0
        %302 = vmatprep.subr.mxu0 0.0
        %303 = vmatpush1.msra.mxu0 0.0
        %304 = vmatprep.subr.mxu0 0.0
        %305 = vmatpush1.msra.mxu0 0.0
        %306 = vmatprep.subr.mxu0 0.0
        %307 = vmatpush1.msra.mxu0 0.0
        %308 = vmatprep.subr.mxu0 0.0
        %309 = vmatpush1.msra.mxu0 0.0
        %310 = vmatprep.subr.mxu0 0.0
        %311 = vmatpush1.msra.mxu0 0.0
        %312 = vmatprep.subr.mxu0 0.0
        %313 = vmatpush1.msra.mxu0 0.0
        %314 = vmatprep.subr.mxu0 0.0
        %315 = vmatpush1.msra.mxu0 %v278
        %316 = vmatprep.subr.mxu0 0.0
        %317 = vmatpush1.msra.mxu0 %v277
        %318 = vmatprep.subr.mxu0 0.0
        %319 = vmatpush1.msra.mxu0 %v276
        %320 = vmatprep.subr.mxu0 0.0
        %321 = vmatpush1.msra.mxu0 %v275
        %322 = vmatprep.subr.mxu0 0.0
        %323 = vmatpush2.msra.mxu0 0.0
        %324 = vmatprep.subr.mxu0 0.0
        %325 = vmatpush2.msra.mxu0 0.0
        %326 = vmatprep.subr.mxu0 0.0
        %327 = vmatpush2.msra.mxu0 0.0
        %328 = vmatprep.subr.mxu0 0.0
        %329 = vmatpush2.msra.mxu0 0.0
        %330 = vmatprep.subr.mxu0 0.0
        %331 = vmatpush2.msra.mxu0 0.0
        %332 = vmatprep.subr.mxu0 0.0
        %333 = vmatpush2.msra.mxu0 0.0
        %334 = vmatprep.subr.mxu0 0.0
        %335 = vmatpush2.msra.mxu0 0.0
        %336 = vmatprep.subr.mxu0 0.0
        %337 = vmatpush2.msra.mxu0 0.0
        %338 = vmatprep.subr.mxu0 0.0
        %339 = vmatpush2.msra.mxu0 0.0
        %340 = vmatprep.subr.mxu0 0.0
        %341 = vmatpush2.msra.mxu0 0.0
        %342 = vmatprep.subr.mxu0 0.0
        %343 = vmatpush2.msra.mxu0 0.0
        %344 = vmatprep.subr.mxu0 0.0
        %345 = vmatpush2.msra.mxu0 0.0
        %346 = vmatprep.subr.mxu0 0.0
        %347 = vmatpush2.msra.mxu0 0.0
        %348 = vmatprep.subr.mxu0 0.0
        %349 = vmatpush2.msra.mxu0 0.0
        %350 = vmatprep.subr.mxu0 0.0
        %351 = vmatpush2.msra.mxu0 0.0
        %352 = vmatprep.subr.mxu0 0.0
        %353 = vmatpush2.msra.mxu0 0.0
        %354 = vmatprep.mubr.f32.mxu0 0.0
        %355 = vmatmul.mubr.f32.gmra.mxu0 %v288
        %v356 = vpop.f32.mrf.mxu0
        %v357 = vadd.f32 %v284, %v356
        %v358 = vpop.f32.mrf.mxu0
        %359 = vdwg.mxu0
        %v360 = vmax.f32 %v357, 0.0
        %v361 = vld [vmem:[%s3] sm:$0xff]
        %v362 = vld [vmem:[%s3 + $0x8] sm:$0xff]
        %v363 = vld [vmem:[%s3 + $0x10] sm:$0xff]
        %v364 = vld [vmem:[%s3 + $0x18] sm:$0xff]
        %v365 = vld [vmem:[%s3 + $0x20] sm:$0xff]
        %v366 = vld [vmem:[%s3 + $0x28] sm:$0xff]
        %v367 = vld [vmem:[%s3 + $0x30] sm:$0xff]
        %v368 = vld [vmem:[%s3 + $0x38] sm:$0xff]
        %vm369 = vcmask 523264
        %v371 = vsel %vm369, %v360, 0
        %373 = vmatprep.subr.mxu0 0.0
        %374 = vmatpush1.msra.mxu0 0.0
        %375 = vmatprep.subr.mxu0 0.0
        %376 = vmatpush1.msra.mxu0 0.0
        %377 = vmatprep.subr.mxu0 0.0
        %378 = vmatpush1.msra.mxu0 0.0
        %379 = vmatprep.subr.mxu0 0.0
        %380 = vmatpush1.msra.mxu0 0.0
        %381 = vmatprep.subr.mxu0 0.0
        %382 = vmatpush1.msra.mxu0 0.0
        %383 = vmatprep.subr.mxu0 0.0
        %384 = vmatpush1.msra.mxu0 0.0
        %385 = vmatprep.subr.mxu0 0.0
        %386 = vmatpush1.msra.mxu0 0.0
        %387 = vmatprep.subr.mxu0 0.0
        %388 = vmatpush1.msra.mxu0 0.0
        %389 = vmatprep.subr.mxu0 0.0
        %390 = vmatpush1.msra.mxu0 %v368
        %391 = vmatprep.subr.mxu0 0.0
        %392 = vmatpush1.msra.mxu0 %v367
        %393 = vmatprep.subr.mxu0 0.0
        %394 = vmatpush1.msra.mxu0 %v366
        %395 = vmatprep.subr.mxu0 0.0
        %396 = vmatpush1.msra.mxu0 %v365
        %397 = vmatprep.subr.mxu0 0.0
        %398 = vmatpush1.msra.mxu0 %v364
        %399 = vmatprep.subr.mxu0 0.0
        %400 = vmatpush1.msra.mxu0 %v363
        %401 = vmatprep.subr.mxu0 0.0
        %402 = vmatpush1.msra.mxu0 %v362
        %403 = vmatprep.subr.mxu0 0.0
        %404 = vmatpush1.msra.mxu0 %v361
        %405 = vmatprep.subr.mxu0 0.0
        %406 = vmatpush2.msra.mxu0 0.0
        %407 = vmatprep.subr.mxu0 0.0
        %408 = vmatpush2.msra.mxu0 0.0
        %409 = vmatprep.subr.mxu0 0.0
        %410 = vmatpush2.msra.mxu0 0.0
        %411 = vmatprep.subr.mxu0 0.0
        %412 = vmatpush2.msra.mxu0 0.0
        %413 = vmatprep.subr.mxu0 0.0
        %414 = vmatpush2.msra.mxu0 0.0
        %415 = vmatprep.subr.mxu0 0.0
        %416 = vmatpush2.msra.mxu0 0.0
        %417 = vmatprep.subr.mxu0 0.0
        %418 = vmatpush2.msra.mxu0 0.0
        %419 = vmatprep.subr.mxu0 0.0
        %420 = vmatpush2.msra.mxu0 0.0
        %421 = vmatprep.subr.mxu0 0.0
        %422 = vmatpush2.msra.mxu0 0.0
        %423 = vmatprep.subr.mxu0 0.0
        %424 = vmatpush2.msra.mxu0 0.0
        %425 = vmatprep.subr.mxu0 0.0
        %426 = vmatpush2.msra.mxu0 0.0
        %427 = vmatprep.subr.mxu0 0.0
        %428 = vmatpush2.msra.mxu0 0.0
        %429 = vmatprep.subr.mxu0 0.0
        %430 = vmatpush2.msra.mxu0 0.0
        %431 = vmatprep.subr.mxu0 0.0
        %432 = vmatpush2.msra.mxu0 0.0
        %433 = vmatprep.subr.mxu0 0.0
        %434 = vmatpush2.msra.mxu0 0.0
        %435 = vmatprep.subr.mxu0 0.0
        %436 = vmatpush2.msra.mxu0 0.0
        %437 = vmatprep.mubr.f32.mxu0 0.0
        %438 = vmatmul.mubr.f32.gmra.mxu0 %v371
        %v439 = vpop.f32.mrf.mxu0
        %v440 = vadd.f32 0.0, %v439
        %v441 = vpop.f32.mrf.mxu0
        %442 = vdwg.mxu0
        %v443 = vadd.f32 %v274, %v440
        %v444 = vld [vmem:[%s4] sm:$0x1]
        %v446 = vlaneseq
        %v447 = vshrl.u32 %v446, 7
        %v448 = vsub.s32 0, %v447
        %v449 = vrot.slane %v444, %v448
        %v451 = vadd.f32 %v443, %v449
        %v452 = vsel %vm286, %v451, 0.0
        %453 = vadd.xlane.f32.xlu0 %v452
        %v454 = vpop.xlane.xlu0 %453
        %v455 = vrcp.pop 32.0
        %v456 = vmul.f32 %v454, %v455
        %v457 = vsub.f32 %v451, %v456
        %v458 = vmul.f32 %v457, %v457
        %v459 = vsel %vm286, %v458, 0.0
        %460 = vadd.xlane.f32.xlu0 %v459
        %v461 = vpop.xlane.xlu0 %460
        %v462 = vmul.f32 %v461, %v455
        %v463 = vadd.f32 %v462, 1e-05
        %v464 = vrsqrt.pop %v463
        %v465 = vmul.f32 %v457, %v464
        %v466 = vld [vmem:[%s5] sm:$0x1]
        %v468 = vlaneseq
        %v469 = vshrl.u32 %v468, 7
        %v470 = vsub.s32 0, %v469
        %v471 = vrot.slane %v466, %v470
        %v473 = vmul.f32 %v465, %v471
        %v474 = vld [vmem:[%s6] sm:$0x1]
        %v476 = vlaneseq
        %v477 = vshrl.u32 %v476, 7
        %v478 = vsub.s32 0, %v477
        %v479 = vrot.slane %v474, %v478
        %v481 = vadd.f32 %v473, %v479
        %482 = vst.msk [vmem:[%s269] sm:$0xff] %vm286, %v481
        %s483 = sand.u32 %s181, 1
        %s484 = scalar_lea.sflag [#allocation3], %s483
        %s485 = sand.u32 %s181, 1
        %s486 = smul.addr %s485, 8
        %s487 = scalar_lea.vmem [#allocation2], %s486
        // Predicated region
        $region49: #{tpu_custom_call.1} parent=47 // pred_check
          %p488 = pneg %p191
        $region50: #{tpu_custom_call.1} parent=47 // pred_check_branch
          %490 = sbr.rel (%p488) target = $region52
        $region51: #{tpu_custom_call.1} parent=47 // pred_region
          %s492 = ssub.s32 128, 128
          %493 = vsyncadd %s484, %s492
          %s494 = smul.addr %s21, 128
          %s495 = scalar_lea.hbm %s7, %s494
          %s497 = sshll.u32 %s487, 4
          %s498 = int_to_ptr.vmem [resolvable:$true] %s497
          %500 = dma.vmem_to_hbm [thread:$0]  %s498, 128, %s495, %s484
        $region52: #{tpu_custom_call.1} parent=47 // pred_fallthru
          _
      $region48: #{tpu_custom_call.1} parent=5 // pred_fallthru
        _
      %p501 = scmp.le.s32.totalorder 2, %s16
      // Predicated region
      $region53: #{tpu_custom_call.1} parent=5 // pred_check
        %p502 = pneg %p501
      $region54: #{tpu_custom_call.1} parent=5 // pred_check_branch
        %504 = sbr.rel (%p502) target = $region56
      $region55: #{tpu_custom_call.1} parent=5 // pred_region
        %s505 = ssub.s32 %s16, 2
        // Predicated region
        $region57: #{tpu_custom_call.1} parent=55 // pred_check
          %p506 = pneg %p197
        $region58: #{tpu_custom_call.1} parent=55 // pred_check_branch
          %508 = sbr.rel (%p506) target = $region60
        $region59: #{tpu_custom_call.1} parent=55 // pred_region
          %s509 = sand.u32 %s182, 1
          %s510 = scalar_lea.sflag [#allocation3], %s509
          %s511 = sand.u32 %s182, 1
          %s512 = smul.addr %s511, 8
          %s513 = scalar_lea.vmem [#allocation2], %s512
          %514 = dma.done %s510, 128
        $region60: #{tpu_custom_call.1} parent=55 // pred_fallthru
          _
      $region56: #{tpu_custom_call.1} parent=5 // pred_fallthru
        _
    $region6: #{tpu_custom_call.1} parent=1 // loop_footer
      %s20 = sadd.s32 1, %s16
    $region7: #{tpu_custom_call.1} parent=1 // loop_footer_branch
      %15 = sbr.rel target = $region3
    $region8: #{tpu_custom_call.1} parent=1 // loop_exit
      _
    %515 = vsyncpa [#allocation3], 1
    %s516 = scalar_lea.sflag [#allocation3], 1
    %517 = vsyncpa %s516, 1

// kernel: tpu_custom_call.1
$region0: #{tpu_custom_call.1}
  #allocation0 [shape = 'u32[]', space=smem, size = 0x4, offset = 0x4, fixed_abs, tag = 'smem constant byte address 0x4 - core index']
  #allocation1 [shape = 'u32[144,128]{1,0:T(1,128)}', space=vmem, size = 0x12000, scoped, tag = 'internal scratch']
  %s0 = inlined_call_operand.vmem [shape: f32[16,32], index: 0, kind: input, shape index: {}]
  %s1 = inlined_call_operand.vmem [shape: f32[32,64], index: 1, kind: input, shape index: {}]
  %s2 = inlined_call_operand.vmem [shape: f32[1,64], index: 2, kind: input, shape index: {}]
  %s3 = inlined_call_operand.vmem [shape: f32[64,32], index: 3, kind: input, shape index: {}]
  %s4 = inlined_call_operand.vmem [shape: f32[1,32], index: 4, kind: input, shape index: {}]
  %s5 = inlined_call_operand.vmem [shape: f32[1,32], index: 5, kind: input, shape index: {}]
  %s6 = inlined_call_operand.vmem [shape: f32[1,32], index: 6, kind: input, shape index: {}]
  %s7 = inlined_call_operand.hbm [shape: f32[16,32], index: 7, kind: output, shape index: {}]
  %s8 = sld [smem:[#allocation0]]
  $region61: #{tpu_custom_call.1} parent=0
    _
  %s10 = ssub.s32 1, %s8
  %s11 = scalar_select 0, %s10, %s8
  $region1: #{tpu_custom_call.1} parent=0
    #allocation2 [shape = 'u8[8192]{0}', space=vmem, size = 0x2000, scoped, tag = 'output window, operand 0']
    #allocation3 [shape = 's32[2]{0}', space=sflag, size = 0x8, scoped, tag = 'scoped memory for tpu_custom_call.1']
    %12 = vsyncpa [#allocation3], 0
    %s13 = scalar_lea.sflag [#allocation3], 1
    %14 = vsyncpa %s13, 0
    loop: start=0, step=1, limit=4
    $region2: #{tpu_custom_call.1} parent=1 // loop_pre_header
      _
    $region3: #{tpu_custom_call.1} parent=1 // loop_header
      %s16 = sphi 0, %s20
      %p17 = scmp.ge.s32.totalorder %s16, 4
      %s26 = sphi 0, %s28
      %s29 = sphi 0, %s26
      %s30 = sphi 0, %s29
      %s46 = sphi 0, %s30
      %s50 = sphi 0, %s50
      %s52 = sphi 0, %s50
      %s53 = sphi 0, %s52
      %s67 = sphi 0, %s53
      %s71 = sphi 0, %s71
      %s73 = sphi 0, %s71
      %s74 = sphi 0, %s73
      %s88 = sphi 0, %s74
      %s92 = sphi 0, %s92
      %s94 = sphi 0, %s92
      %s95 = sphi 0, %s94
      %s109 = sphi 0, %s95
      %s113 = sphi 0, %s113
      %s115 = sphi 0, %s113
      %s116 = sphi 0, %s115
      %s130 = sphi 0, %s116
      %s134 = sphi 0, %s134
      %s136 = sphi 0, %s134
      %s137 = sphi 0, %s136
      %s151 = sphi 0, %s137
      %s155 = sphi 0, %s155
      %s157 = sphi 0, %s155
      %s158 = sphi 0, %s157
      %s172 = sphi 0, %s158
      %s178 = sphi 0, %s180
      %s181 = sphi 0, %s178
      %s182 = sphi 0, %s181
      %s198 = sphi 0, %s182
    $region4: #{tpu_custom_call.1} parent=1 // loop_header_branch
      %19 = sbr.rel (%p17) target = $region8
    $region5: #{tpu_custom_call.1} parent=1 // loop_body
      %s21 = ssub.s32 %s16, 1
      %s22 = ssub.s32 %s16, 2
      %s23 = sadd.s32 %s16, 1
      %s24 = ssub.s32 %s16, %s23
      %p25 = scmp.eq.s32.totalorder %s24, 0
      %s27 = sadd.s32 %s26, 1
      %s28 = scalar_select %p25, %s26, %s27
      %p31 = pneg %p25
      %p32 = scmp.eq.s32.totalorder %s16, 1
      %p33 = por %p31, %p32
      %p34 = scmp.ne.s32.totalorder %s26, %s29
      %p35 = scmp.eq.s32.totalorder %s16, 0
      %p36 = por %p34, %p35
      %p37 = scmp.ne.s32.totalorder %s26, %s29
      %p38 = scmp.eq.s32.totalorder %s21, 1
      %p39 = por %p37, %p38
      %p40 = scmp.ne.s32.totalorder %s29, %s30
      %p41 = scmp.eq.s32.totalorder %s21, 0
      %p42 = por %p40, %p41
      %p43 = scmp.ne.s32.totalorder %s29, %s30
      %p44 = scmp.eq.s32.totalorder %s22, 1
      %p45 = por %p43, %p44
      %p47 = scmp.ne.s32.totalorder %s30, %s46
      %p48 = scmp.eq.s32.totalorder %s22, 0
      %p49 = por %p47, %p48
      %s51 = sadd.s32 %s50, 1
      %p54 = scmp.eq.s32.totalorder %s16, 1
      %p55 = scmp.ne.s32.totalorder %s50, %s52
      %p56 = scmp.eq.s32.totalorder %s16, 0
      %p57 = por %p55, %p56
      %p58 = scmp.ne.s32.totalorder %s50, %s52
      %p59 = scmp.eq.s32.totalorder %s21, 1
      %p60 = por %p58, %p59
      %p61 = scmp.ne.s32.totalorder %s52, %s53
      %p62 = scmp.eq.s32.totalorder %s21, 0
      %p63 = por %p61, %p62
      %p64 = scmp.ne.s32.totalorder %s52, %s53
      %p65 = scmp.eq.s32.totalorder %s22, 1
      %p66 = por %p64, %p65
      %p68 = scmp.ne.s32.totalorder %s53, %s67
      %p69 = scmp.eq.s32.totalorder %s22, 0
      %p70 = por %p68, %p69
      %s72 = sadd.s32 %s71, 1
      %p75 = scmp.eq.s32.totalorder %s16, 1
      %p76 = scmp.ne.s32.totalorder %s71, %s73
      %p77 = scmp.eq.s32.totalorder %s16, 0
      %p78 = por %p76, %p77
      %p79 = scmp.ne.s32.totalorder %s71, %s73
      %p80 = scmp.eq.s32.totalorder %s21, 1
      %p81 = por %p79, %p80
      %p82 = scmp.ne.s32.totalorder %s73, %s74
      %p83 = scmp.eq.s32.totalorder %s21, 0
      %p84 = por %p82, %p83
      %p85 = scmp.ne.s32.totalorder %s73, %s74
      %p86 = scmp.eq.s32.totalorder %s22, 1
      %p87 = por %p85, %p86
      %p89 = scmp.ne.s32.totalorder %s74, %s88
      %p90 = scmp.eq.s32.totalorder %s22, 0
      %p91 = por %p89, %p90
      %s93 = sadd.s32 %s92, 1
      %p96 = scmp.eq.s32.totalorder %s16, 1
      %p97 = scmp.ne.s32.totalorder %s92, %s94
      %p98 = scmp.eq.s32.totalorder %s16, 0
      %p99 = por %p97, %p98
      %p100 = scmp.ne.s32.totalorder %s92, %s94
      %p101 = scmp.eq.s32.totalorder %s21, 1
      %p102 = por %p100, %p101
      %p103 = scmp.ne.s32.totalorder %s94, %s95
      %p104 = scmp.eq.s32.totalorder %s21, 0
      %p105 = por %p103, %p104
      %p106 = scmp.ne.s32.totalorder %s94, %s95
      %p107 = scmp.eq.s32.totalorder %s22, 1
      %p108 = por %p106, %p107
      %p110 = scmp.ne.s32.totalorder %s95, %s109
      %p111 = scmp.eq.s32.totalorder %s22, 0
      %p112 = por %p110, %p111
      %s114 = sadd.s32 %s113, 1
      %p117 = scmp.eq.s32.totalorder %s16, 1
      %p118 = scmp.ne.s32.totalorder %s113, %s115
      %p119 = scmp.eq.s32.totalorder %s16, 0
      %p120 = por %p118, %p119
      %p121 = scmp.ne.s32.totalorder %s113, %s115
      %p122 = scmp.eq.s32.totalorder %s21, 1
      %p123 = por %p121, %p122
      %p124 = scmp.ne.s32.totalorder %s115, %s116
      %p125 = scmp.eq.s32.totalorder %s21, 0
      %p126 = por %p124, %p125
      %p127 = scmp.ne.s32.totalorder %s115, %s116
      %p128 = scmp.eq.s32.totalorder %s22, 1
      %p129 = por %p127, %p128
      %p131 = scmp.ne.s32.totalorder %s116, %s130
      %p132 = scmp.eq.s32.totalorder %s22, 0
      %p133 = por %p131, %p132
      %s135 = sadd.s32 %s134, 1
      %p138 = scmp.eq.s32.totalorder %s16, 1
      %p139 = scmp.ne.s32.totalorder %s134, %s136
      %p140 = scmp.eq.s32.totalorder %s16, 0
      %p141 = por %p139, %p140
      %p142 = scmp.ne.s32.totalorder %s134, %s136
      %p143 = scmp.eq.s32.totalorder %s21, 1
      %p144 = por %p142, %p143
      %p145 = scmp.ne.s32.totalorder %s136, %s137
      %p146 = scmp.eq.s32.totalorder %s21, 0
      %p147 = por %p145, %p146
      %p148 = scmp.ne.s32.totalorder %s136, %s137
      %p149 = scmp.eq.s32.totalorder %s22, 1
      %p150 = por %p148, %p149
      %p152 = scmp.ne.s32.totalorder %s137, %s151
      %p153 = scmp.eq.s32.totalorder %s22, 0
      %p154 = por %p152, %p153
      %s156 = sadd.s32 %s155, 1
      %p159 = scmp.eq.s32.totalorder %s16, 1
      %p160 = scmp.ne.s32.totalorder %s155, %s157
      %p161 = scmp.eq.s32.totalorder %s16, 0
      %p162 = por %p160, %p161
      %p163 = scmp.ne.s32.totalorder %s155, %s157
      %p164 = scmp.eq.s32.totalorder %s21, 1
      %p165 = por %p163, %p164
      %p166 = scmp.ne.s32.totalorder %s157, %s158
      %p167 = scmp.eq.s32.totalorder %s21, 0
      %p168 = por %p166, %p167
      %p169 = scmp.ne.s32.totalorder %s157, %s158
      %p170 = scmp.eq.s32.totalorder %s22, 1
      %p171 = por %p169, %p170
      %p173 = scmp.ne.s32.totalorder %s158, %s172
      %p174 = scmp.eq.s32.totalorder %s22, 0
      %p175 = por %p173, %p174
      %s176 = ssub.s32 %s16, %s23
      %p177 = scmp.eq.s32.totalorder %s176, 0
      %s179 = sadd.s32 %s178, 1
      %s180 = scalar_select %p177, %s178, %s179
      %p183 = pneg %p177
      %p184 = scmp.eq.s32.totalorder %s16, 1
      %p185 = por %p183, %p184
      %p186 = scmp.ne.s32.totalorder %s178, %s181
      %p187 = scmp.eq.s32.totalorder %s16, 0
      %p188 = por %p186, %p187
      %p189 = scmp.ne.s32.totalorder %s178, %s181
      %p190 = scmp.eq.s32.totalorder %s21, 1
      %p191 = por %p189, %p190
      %p192 = scmp.ne.s32.totalorder %s181, %s182
      %p193 = scmp.eq.s32.totalorder %s21, 0
      %p194 = por %p192, %p193
      %p195 = scmp.ne.s32.totalorder %s181, %s182
      %p196 = scmp.eq.s32.totalorder %s22, 1
      %p197 = por %p195, %p196
      %p199 = scmp.ne.s32.totalorder %s182, %s198
      %p200 = scmp.eq.s32.totalorder %s22, 0
      %p201 = por %p199, %p200
      %p202 = scmp.le.s32.totalorder 1, %s16
      %p203 = scmp.lt.s32.totalorder %s16, 3
      %p204 = pnand %p202, %p203
      %p205 = pneg %p204
      // Predicated region
      $region9: #{tpu_custom_call.1} parent=5 // pred_check
        _
      $region10: #{tpu_custom_call.1} parent=5 // pred_check_branch
        %207 = sbr.rel (%p204) target = $region12
      $region11: #{tpu_custom_call.1} parent=5 // pred_region
        %s208 = ssub.s32 %s16, 1
        // Predicated region
        $region13: #{tpu_custom_call.1} parent=11 // pred_check
          %p209 = pneg %p63
        $region14: #{tpu_custom_call.1} parent=11 // pred_check_branch
          %211 = sbr.rel (%p209) target = $region16
        $region15: #{tpu_custom_call.1} parent=11 // pred_region
          _
        $region16: #{tpu_custom_call.1} parent=11 // pred_fallthru
          _
        // Predicated region
        $region17: #{tpu_custom_call.1} parent=11 // pred_check
          %p212 = pneg %p84
        $region18: #{tpu_custom_call.1} parent=11 // pred_check_branch
          %214 = sbr.rel (%p212) target = $region20
        $region19: #{tpu_custom_call.1} parent=11 // pred_region
          _
        $region20: #{tpu_custom_call.1} parent=11 // pred_fallthru
          _
        // Predicated region
        $region21: #{tpu_custom_call.1} parent=11 // pred_check
          %p215 = pneg %p105
        $region22: #{tpu_custom_call.1} parent=11 // pred_check_branch
          %217 = sbr.rel (%p215) target = $region24
        $region23: #{tpu_custom_call.1} parent=11 // pred_region
          _
        $region24: #{tpu_custom_call.1} parent=11 // pred_fallthru
          _
        // Predicated region
        $region25: #{tpu_custom_call.1} parent=11 // pred_check
          %p218 = pneg %p126
        $region26: #{tpu_custom_call.1} parent=11 // pred_check_branch
          %220 = sbr.rel (%p218) target = $region28
        $region27: #{tpu_custom_call.1} parent=11 // pred_region
          _
        $region28: #{tpu_custom_call.1} parent=11 // pred_fallthru
          _
        // Predicated region
        $region29: #{tpu_custom_call.1} parent=11 // pred_check
          %p221 = pneg %p147
        $region30: #{tpu_custom_call.1} parent=11 // pred_check_branch
          %223 = sbr.rel (%p221) target = $region32
        $region31: #{tpu_custom_call.1} parent=11 // pred_region
          _
        $region32: #{tpu_custom_call.1} parent=11 // pred_fallthru
          _
        // Predicated region
        $region33: #{tpu_custom_call.1} parent=11 // pred_check
          %p224 = pneg %p168
        $region34: #{tpu_custom_call.1} parent=11 // pred_check_branch
          %226 = sbr.rel (%p224) target = $region36
        $region35: #{tpu_custom_call.1} parent=11 // pred_region
          _
        $region36: #{tpu_custom_call.1} parent=11 // pred_fallthru
          _
      $region12: #{tpu_custom_call.1} parent=5 // pred_fallthru
        _
      %p227 = scmp.lt.s32.totalorder %s16, 2
      // Predicated region
      $region37: #{tpu_custom_call.1} parent=5 // pred_check
        %p228 = pneg %p227
      $region38: #{tpu_custom_call.1} parent=5 // pred_check_branch
        %230 = sbr.rel (%p228) target = $region40
      $region39: #{tpu_custom_call.1} parent=5 // pred_region
        // Predicated region
        $region41: #{tpu_custom_call.1} parent=39 // pred_check
          %p231 = pneg %p36
        $region42: #{tpu_custom_call.1} parent=39 // pred_check_branch
          %233 = sbr.rel (%p231) target = $region44
        $region43: #{tpu_custom_call.1} parent=39 // pred_region
          %p234 = scmp.lt.s32.totalorder %s16, 1
          %s235 = scalar_select %p234, %s16, 1
          %s236 = smul.addr %s235, 8
          %s237 = scalar_lea.vmem %s0, %s236
        $region44: #{tpu_custom_call.1} parent=39 // pred_fallthru
          _
      $region40: #{tpu_custom_call.1} parent=5 // pred_fallthru
        _
      %p238 = scmp.le.s32.totalorder 1, %s16
      %p239 = scmp.lt.s32.totalorder %s16, 3
      %p240 = pnand %p238, %p239
      %p241 = pneg %p240
      // Predicated region
      $region45: #{tpu_custom_call.1} parent=5 // pred_check
        _
      $region46: #{tpu_custom_call.1} parent=5 // pred_check_branch
        %243 = sbr.rel (%p240) target = $region48
      $region47: #{tpu_custom_call.1} parent=5 // pred_region
        %s244 = ssub.s32 %s16, 1
        %p245 = scmp.lt.s32.totalorder %s21, 1
        %s246 = scalar_select %p245, %s21, 1
        %s247 = smul.addr %s246, 8
        %s248 = scalar_lea.vmem %s0, %s247
        %p249 = pneg %p42
        %p250 = pneg %p39
        %p251 = pneg %p63
        %p252 = pneg %p60
        %p253 = pneg %p84
        %p254 = pneg %p81
        %p255 = pneg %p105
        %p256 = pneg %p102
        %p257 = pneg %p126
        %p258 = pneg %p123
        %p259 = pneg %p147
        %p260 = pneg %p144
        %p261 = pneg %p168
        %p262 = pneg %p165
        %p263 = pneg %p194
        %p264 = pneg %p191
        %s265 = sand.u32 %s181, 1
        %s266 = scalar_lea.sflag [#allocation3], %s265
        %s267 = sand.u32 %s181, 1
        %s268 = smul.addr %s267, 8
        %s269 = scalar_lea.vmem [#allocation2], %s268
        %p270 = scmp.lt.s32.totalorder %s21, 1
        %s271 = scalar_select %p270, %s21, 1
        %s272 = smul.addr %s271, 8
        %s273 = scalar_lea.vmem %s0, %s272
        %v274 = vld [vmem:[%s273] sm:$0xff]
        %v275 = vld [vmem:[%s1] sm:$0xff]
        %v276 = vld [vmem:[%s1 + $0x8] sm:$0xff]
        %v277 = vld [vmem:[%s1 + $0x10] sm:$0xff]
        %v278 = vld [vmem:[%s1 + $0x18] sm:$0xff]
        %v279 = vld [vmem:[%s2] sm:$0x1]
        %v281 = vlaneseq
        %v282 = vshrl.u32 %v281, 7
        %v283 = vsub.s32 0, %v282
        %v284 = vrot.slane %v279, %v283
        %vm286 = vcmask 261120
        %v288 = vsel %vm286, %v274, 0
        %290 = vmatprep.subr.mxu0 0.0
        %291 = vmatpush1.msra.mxu0 0.0
        %292 = vmatprep.subr.mxu0 0.0
        %293 = vmatpush1.msra.mxu0 0.0
        %294 = vmatprep.subr.mxu0 0.0
        %295 = vmatpush1.msra.mxu0 0.0
        %296 = vmatprep.subr.mxu0 0.0
        %297 = vmatpush1.msra.mxu0 0.0
        %298 = vmatprep.subr.mxu0 0.0
        %299 = vmatpush1.msra.mxu0 0.0
        %300 = vmatprep.subr.mxu0 0.0
        %301 = vmatpush1.msra.mxu0 0.0
        %302 = vmatprep.subr.mxu0 0.0
        %303 = vmatpush1.msra.mxu0 0.0
        %304 = vmatprep.subr.mxu0 0.0
        %305 = vmatpush1.msra.mxu0 0.0
        %306 = vmatprep.subr.mxu0 0.0
        %307 = vmatpush1.msra.mxu0 0.0
        %308 = vmatprep.subr.mxu0 0.0
        %309 = vmatpush1.msra.mxu0 0.0
        %310 = vmatprep.subr.mxu0 0.0
        %311 = vmatpush1.msra.mxu0 0.0
        %312 = vmatprep.subr.mxu0 0.0
        %313 = vmatpush1.msra.mxu0 0.0
        %314 = vmatprep.subr.mxu0 0.0
        %315 = vmatpush1.msra.mxu0 %v278
        %316 = vmatprep.subr.mxu0 0.0
        %317 = vmatpush1.msra.mxu0 %v277
        %318 = vmatprep.subr.mxu0 0.0
        %319 = vmatpush1.msra.mxu0 %v276
        %320 = vmatprep.subr.mxu0 0.0
        %321 = vmatpush1.msra.mxu0 %v275
        %322 = vmatprep.subr.mxu0 0.0
        %323 = vmatpush2.msra.mxu0 0.0
        %324 = vmatprep.subr.mxu0 0.0
        %325 = vmatpush2.msra.mxu0 0.0
        %326 = vmatprep.subr.mxu0 0.0
        %327 = vmatpush2.msra.mxu0 0.0
        %328 = vmatprep.subr.mxu0 0.0
        %329 = vmatpush2.msra.mxu0 0.0
        %330 = vmatprep.subr.mxu0 0.0
        %331 = vmatpush2.msra.mxu0 0.0
        %332 = vmatprep.subr.mxu0 0.0
        %333 = vmatpush2.msra.mxu0 0.0
        %334 = vmatprep.subr.mxu0 0.0
        %335 = vmatpush2.msra.mxu0 0.0
        %336 = vmatprep.subr.mxu0 0.0
        %337 = vmatpush2.msra.mxu0 0.0
        %338 = vmatprep.subr.mxu0 0.0
        %339 = vmatpush2.msra.mxu0 0.0
        %340 = vmatprep.subr.mxu0 0.0
        %341 = vmatpush2.msra.mxu0 0.0
        %342 = vmatprep.subr.mxu0 0.0
        %343 = vmatpush2.msra.mxu0 0.0
        %344 = vmatprep.subr.mxu0 0.0
        %345 = vmatpush2.msra.mxu0 0.0
        %346 = vmatprep.subr.mxu0 0.0
        %347 = vmatpush2.msra.mxu0 0.0
        %348 = vmatprep.subr.mxu0 0.0
        %349 = vmatpush2.msra.mxu0 0.0
        %350 = vmatprep.subr.mxu0 0.0
        %351 = vmatpush2.msra.mxu0 0.0
        %352 = vmatprep.subr.mxu0 0.0
        %353 = vmatpush2.msra.mxu0 0.0
        %354 = vmatprep.mubr.f32.mxu0 0.0
        %355 = vmatmul.mubr.f32.gmra.mxu0 %v288
        %v356 = vpop.f32.mrf.mxu0
        %v357 = vadd.f32 %v284, %v356
        %v358 = vpop.f32.mrf.mxu0
        %359 = vdwg.mxu0
        %v360 = vmax.f32 %v357, 0.0
        %v361 = vld [vmem:[%s3] sm:$0xff]
        %v362 = vld [vmem:[%s3 + $0x8] sm:$0xff]
        %v363 = vld [vmem:[%s3 + $0x10] sm:$0xff]
        %v364 = vld [vmem:[%s3 + $0x18] sm:$0xff]
        %v365 = vld [vmem:[%s3 + $0x20] sm:$0xff]
        %v366 = vld [vmem:[%s3 + $0x28] sm:$0xff]
        %v367 = vld [vmem:[%s3 + $0x30] sm:$0xff]
        %v368 = vld [vmem:[%s3 + $0x38] sm:$0xff]
        %vm369 = vcmask 523264
        %v371 = vsel %vm369, %v360, 0
        %373 = vmatprep.subr.mxu0 0.0
        %374 = vmatpush1.msra.mxu0 0.0
        %375 = vmatprep.subr.mxu0 0.0
        %376 = vmatpush1.msra.mxu0 0.0
        %377 = vmatprep.subr.mxu0 0.0
        %378 = vmatpush1.msra.mxu0 0.0
        %379 = vmatprep.subr.mxu0 0.0
        %380 = vmatpush1.msra.mxu0 0.0
        %381 = vmatprep.subr.mxu0 0.0
        %382 = vmatpush1.msra.mxu0 0.0
        %383 = vmatprep.subr.mxu0 0.0
        %384 = vmatpush1.msra.mxu0 0.0
        %385 = vmatprep.subr.mxu0 0.0
        %386 = vmatpush1.msra.mxu0 0.0
        %387 = vmatprep.subr.mxu0 0.0
        %388 = vmatpush1.msra.mxu0 0.0
        %389 = vmatprep.subr.mxu0 0.0
        %390 = vmatpush1.msra.mxu0 %v368
        %391 = vmatprep.subr.mxu0 0.0
        %392 = vmatpush1.msra.mxu0 %v367
        %393 = vmatprep.subr.mxu0 0.0
        %394 = vmatpush1.msra.mxu0 %v366
        %395 = vmatprep.subr.mxu0 0.0
        %396 = vmatpush1.msra.mxu0 %v365
        %397 = vmatprep.subr.mxu0 0.0
        %398 = vmatpush1.msra.mxu0 %v364
        %399 = vmatprep.subr.mxu0 0.0
        %400 = vmatpush1.msra.mxu0 %v363
        %401 = vmatprep.subr.mxu0 0.0
        %402 = vmatpush1.msra.mxu0 %v362
        %403 = vmatprep.subr.mxu0 0.0
        %404 = vmatpush1.msra.mxu0 %v361
        %405 = vmatprep.subr.mxu0 0.0
        %406 = vmatpush2.msra.mxu0 0.0
        %407 = vmatprep.subr.mxu0 0.0
        %408 = vmatpush2.msra.mxu0 0.0
        %409 = vmatprep.subr.mxu0 0.0
        %410 = vmatpush2.msra.mxu0 0.0
        %411 = vmatprep.subr.mxu0 0.0
        %412 = vmatpush2.msra.mxu0 0.0
        %413 = vmatprep.subr.mxu0 0.0
        %414 = vmatpush2.msra.mxu0 0.0
        %415 = vmatprep.subr.mxu0 0.0
        %416 = vmatpush2.msra.mxu0 0.0
        %417 = vmatprep.subr.mxu0 0.0
        %418 = vmatpush2.msra.mxu0 0.0
        %419 = vmatprep.subr.mxu0 0.0
        %420 = vmatpush2.msra.mxu0 0.0
        %421 = vmatprep.subr.mxu0 0.0
        %422 = vmatpush2.msra.mxu0 0.0
        %423 = vmatprep.subr.mxu0 0.0
        %424 = vmatpush2.msra.mxu0 0.0
        %425 = vmatprep.subr.mxu0 0.0
        %426 = vmatpush2.msra.mxu0 0.0
        %427 = vmatprep.subr.mxu0 0.0
        %428 = vmatpush2.msra.mxu0 0.0
        %429 = vmatprep.subr.mxu0 0.0
        %430 = vmatpush2.msra.mxu0 0.0
        %431 = vmatprep.subr.mxu0 0.0
        %432 = vmatpush2.msra.mxu0 0.0
        %433 = vmatprep.subr.mxu0 0.0
        %434 = vmatpush2.msra.mxu0 0.0
        %435 = vmatprep.subr.mxu0 0.0
        %436 = vmatpush2.msra.mxu0 0.0
        %437 = vmatprep.mubr.f32.mxu0 0.0
        %438 = vmatmul.mubr.f32.gmra.mxu0 %v371
        %v439 = vpop.f32.mrf.mxu0
        %v440 = vadd.f32 0.0, %v439
        %v441 = vpop.f32.mrf.mxu0
        %442 = vdwg.mxu0
        %v443 = vadd.f32 %v274, %v440
        %v444 = vld [vmem:[%s4] sm:$0x1]
        %v446 = vlaneseq
        %v447 = vshrl.u32 %v446, 7
        %v448 = vsub.s32 0, %v447
        %v449 = vrot.slane %v444, %v448
        %v451 = vadd.f32 %v443, %v449
        %v452 = vsel %vm286, %v451, 0.0
        %453 = vadd.xlane.f32.xlu0 %v452
        %v454 = vpop.xlane.xlu0 %453
        %v455 = vrcp.pop 32.0
        %v456 = vmul.f32 %v454, %v455
        %v457 = vsub.f32 %v451, %v456
        %v458 = vmul.f32 %v457, %v457
        %v459 = vsel %vm286, %v458, 0.0
        %460 = vadd.xlane.f32.xlu0 %v459
        %v461 = vpop.xlane.xlu0 %460
        %v462 = vmul.f32 %v461, %v455
        %v463 = vadd.f32 %v462, 1e-05
        %v464 = vrsqrt.pop %v463
        %v465 = vmul.f32 %v457, %v464
        %v466 = vld [vmem:[%s5] sm:$0x1]
        %v468 = vlaneseq
        %v469 = vshrl.u32 %v468, 7
        %v470 = vsub.s32 0, %v469
        %v471 = vrot.slane %v466, %v470
        %v473 = vmul.f32 %v465, %v471
        %v474 = vld [vmem:[%s6] sm:$0x1]
        %v476 = vlaneseq
        %v477 = vshrl.u32 %v476, 7
        %v478 = vsub.s32 0, %v477
        %v479 = vrot.slane %v474, %v478
        %v481 = vadd.f32 %v473, %v479
        %482 = vst.msk [vmem:[%s269] sm:$0xff] %vm286, %v481
        %s483 = sand.u32 %s181, 1
        %s484 = scalar_lea.sflag [#allocation3], %s483
        %s485 = sand.u32 %s181, 1
        %s486 = smul.addr %s485, 8
        %s487 = scalar_lea.vmem [#allocation2], %s486
        // Predicated region
        $region49: #{tpu_custom_call.1} parent=47 // pred_check
          %p488 = pneg %p191
        $region50: #{tpu_custom_call.1} parent=47 // pred_check_branch
          %490 = sbr.rel (%p488) target = $region52
        $region51: #{tpu_custom_call.1} parent=47 // pred_region
          %s492 = ssub.s32 128, 128
          %493 = vsyncadd %s484, %s492
          %s494 = smul.addr %s21, 128
          %s495 = scalar_lea.hbm %s7, %s494
          %s497 = sshll.u32 %s487, 4
          %s498 = int_to_ptr.vmem [resolvable:$true] %s497
          %500 = dma.vmem_to_hbm [thread:$0]  %s498, 128, %s495, %s484
        $region52: #{tpu_custom_call.1} parent=47 // pred_fallthru
          _
      $region48: #{tpu_custom_call.1} parent=5 // pred_fallthru
        _
      %p501 = scmp.le.s32.totalorder 2, %s16
      // Predicated region
      $region53: #{tpu_custom_call.1} parent=5 // pred_check
        %p502 = pneg %p501
      $region54: #{tpu_custom_call.1} parent=5 // pred_check_branch
        %504 = sbr.rel (%p502) target = $region56
      $region55: #{tpu_custom_call.1} parent=5 // pred_region
        %s505 = ssub.s32 %s16, 2
        // Predicated region
        $region57: #{tpu_custom_call.1} parent=55 // pred_check
          %p506 = pneg %p197
        $region58: #{tpu_custom_call.1} parent=55 // pred_check_branch
          %508 = sbr.rel (%p506) target = $region60
        $region59: #{tpu_custom_call.1} parent=55 // pred_region
          %s509 = sand.u32 %s182, 1
          %s510 = scalar_lea.sflag [#allocation3], %s509
          %s511 = sand.u32 %s182, 1
          %s512 = smul.addr %s511, 8
          %s513 = scalar_lea.vmem [#allocation2], %s512
          %514 = dma.done %s510, 128
        $region60: #{tpu_custom_call.1} parent=55 // pred_fallthru
          _
      $region56: #{tpu_custom_call.1} parent=5 // pred_fallthru
        _
    $region6: #{tpu_custom_call.1} parent=1 // loop_footer
      %s20 = sadd.s32 1, %s16
    $region7: #{tpu_custom_call.1} parent=1 // loop_footer_branch
      %15 = sbr.rel target = $region3
    $region8: #{tpu_custom_call.1} parent=1 // loop_exit
      _
    %515 = vsyncpa [#allocation3], 1
    %s516 = scalar_lea.sflag [#allocation3], 1
    %517 = vsyncpa %s516, 1

</llo_original>
